<compile_context>
chip_gen: v6e
topology: v6e:2x2x1
jax: 0.10.0
libtpu: 0.0.40
codegen_flags: <defaults>
</compile_context>

<pallas_src>
import functools
import math

import jax
import jax.numpy as jnp
from jax.experimental import pallas as pl
from jax.experimental.pallas import tpu as pltpu


LANE = 128

# Generation-aware scoped-VMEM cap: ~75% of physical VMEM (96 MiB on v5e/v6e's 128 MiB,
# 48 MiB on v7x's 64 MiB), capped at 100 MiB.
try:
    _VMEM_PHYS = int(pltpu.get_tpu_info().vmem_capacity_bytes)
except Exception:   # API drift / unknown chip -> conservative default
    _VMEM_PHYS = 64 * 1024 * 1024
VMEM_LIMIT = min((_VMEM_PHYS * 3) // 4, 100 * 1024 * 1024)


def _pick_tile(dim, candidates):
    """Largest candidate tile that evenly divides `dim`, else the full dim."""
    # TODO(synk): non-divisible large dims fall back to one full-dim block; a cdiv grid
    #             with masked last tiles would bound VMEM for arbitrary shapes.
    for c in candidates:
        if dim >= c and dim % c == 0:
            return c
    return dim


def _round_up(x, m):
    return ((x + m - 1) // m) * m


def _fits_weight_resident(tm, k, n, x_itemsize, w_itemsize, with_residual=False):
    """Rough VMEM budget check for the weight-resident (no N/K tiling) linear path."""
    w_bytes = k * n * w_itemsize * 2            # weight block (counted double-buffered)
    a_bytes = tm * k * x_itemsize * 2           # activation tile, double-buffered
    o_bytes = tm * n * 2 * 2                    # bf16 output tile, double-buffered
    r_bytes = tm * n * 2 * 2 if with_residual else 0
    misc = 4 * n * 4 * 2                        # bias / ln params
    return (w_bytes + a_bytes + o_bytes + r_bytes + misc) <= VMEM_LIMIT // 2


def _ln_epilogue(xx, g, bb, eps):
    mu = jnp.mean(xx, axis=-1, keepdims=True)
    var = jnp.mean(jnp.square(xx - mu), axis=-1, keepdims=True)
    return (xx - mu) * jax.lax.rsqrt(var + eps) * g + bb


# --------------------------------------------------------------------------
# Linear (+ optional gelu): weight-resident primary path, 3-D tiled fallback
# --------------------------------------------------------------------------
def _linear_wres_kernel(a_ref, w_ref, b_ref, o_ref, *, activation):
    acc = jnp.dot(a_ref[...].astype(jnp.bfloat16), w_ref[...],
                  preferred_element_type=jnp.float32) + b_ref[...]
    if activation == "gelu":
        # TODO(synk): tanh-approximate gelu (EUP-friendly); HF BERT uses exact erf gelu.
        acc = jax.nn.gelu(acc, approximate=True)
    o_ref[...] = acc.astype(o_ref.dtype)


def _linear_tiled_kernel(a_ref, w_ref, b_ref, o_ref, acc_ref, *, activation):
    @pl.when(pl.program_id(2) == 0)
    def _():
        acc_ref[...] = jnp.zeros_like(acc_ref)

    acc_ref[...] += jnp.dot(a_ref[...].astype(jnp.bfloat16), w_ref[...],
                            preferred_element_type=jnp.float32)

    @pl.when(pl.program_id(2) == pl.num_programs(2) - 1)
    def _():
        acc = acc_ref[...] + b_ref[...]
        if activation == "gelu":
            acc = jax.nn.gelu(acc, approximate=True)
        o_ref[...] = acc.astype(o_ref.dtype)


def linear(x, w, b, activation=None):
    m, k = x.shape
    n = w.shape[1]
    tm = _pick_tile(m, (512, 256, 128, 64, 32, 16, 8))
    if _fits_weight_resident(tm, k, n, x.dtype.itemsize, w.dtype.itemsize):
        # Weight-resident path: every operand DMA'd exactly once, 1-D grid over rows.
        return pl.pallas_call(
            functools.partial(_linear_wres_kernel, activation=activation),
            out_shape=jax.ShapeDtypeStruct((m, n), jnp.bfloat16),
            grid=(m // tm,),
            in_specs=[pl.BlockSpec((tm, k), lambda i: (i, 0)),
                      pl.BlockSpec((k, n), lambda i: (0, 0)),
                      pl.BlockSpec((1, n), lambda i: (0, 0))],
            out_specs=pl.BlockSpec((tm, n), lambda i: (i, 0)),
            compiler_params=pltpu.CompilerParams(
                dimension_semantics=("parallel",),
                vmem_limit_bytes=VMEM_LIMIT),
        )(x, w, b.reshape(1, n))
    # Fallback: 3-D tiled matmul with f32 VMEM accumulator (weights too big for VMEM).
    tn = _pick_tile(n, (512, 256, 128))
    tk = _pick_tile(k, (1024, 512, 256, 128))
    return pl.pallas_call(
        functools.partial(_linear_tiled_kernel, activation=activation),
        out_shape=jax.ShapeDtypeStruct((m, n), jnp.bfloat16),
        grid=(m // tm, n // tn, k // tk),
        in_specs=[pl.BlockSpec((tm, tk), lambda i, j, kk: (i, kk)),
                  pl.BlockSpec((tk, tn), lambda i, j, kk: (kk, j)),
                  pl.BlockSpec((1, tn), lambda i, j, kk: (0, j))],
        out_specs=pl.BlockSpec((tm, tn), lambda i, j, kk: (i, j)),
        scratch_shapes=[pltpu.VMEM((tm, tn), jnp.float32)],
        compiler_params=pltpu.CompilerParams(
            dimension_semantics=("parallel", "parallel", "arbitrary"),
            vmem_limit_bytes=VMEM_LIMIT),
    )(x, w, b.reshape(1, n))


# --------------------------------------------------------------------------
# Linear + bias + residual + LayerNorm (fused epilogue)
# --------------------------------------------------------------------------
def _linear_res_ln_wres_kernel(a_ref, w_ref, b_ref, r_ref, g_ref, bb_ref, o_ref, *, eps):
    acc = jnp.dot(a_ref[...].astype(jnp.bfloat16), w_ref[...],
                  preferred_element_type=jnp.float32)
    xx = acc + b_ref[...] + r_ref[...].astype(jnp.float32)
    o_ref[...] = _ln_epilogue(xx, g_ref[...], bb_ref[...], eps).astype(o_ref.dtype)


def _linear_res_ln_tiled_kernel(a_ref, w_ref, b_ref, r_ref, g_ref, bb_ref, o_ref,
                                acc_ref, *, eps):
    @pl.when(pl.program_id(1) == 0)
    def _():
        acc_ref[...] = jnp.zeros_like(acc_ref)

    acc_ref[...] += jnp.dot(a_ref[...].astype(jnp.bfloat16), w_ref[...],
                            preferred_element_type=jnp.float32)

    @pl.when(pl.program_id(1) == pl.num_programs(1) - 1)
    def _():
        xx = acc_ref[...] + b_ref[...] + r_ref[...].astype(jnp.float32)
        o_ref[...] = _ln_epilogue(xx, g_ref[...], bb_ref[...], eps).astype(o_ref.dtype)


def linear_res_layernorm(x, w, b, residual, gamma, beta, eps=1e-12):
    m, k = x.shape
    n = w.shape[1]
    tm = _pick_tile(m, (512, 256, 128, 64, 32, 16, 8))
    if _fits_weight_resident(tm, k, n, x.dtype.itemsize, w.dtype.itemsize,
                             with_residual=True):
        return pl.pallas_call(
            functools.partial(_linear_res_ln_wres_kernel, eps=eps),
            out_shape=jax.ShapeDtypeStruct((m, n), jnp.bfloat16),
            grid=(m // tm,),
            in_specs=[pl.BlockSpec((tm, k), lambda i: (i, 0)),
                      pl.BlockSpec((k, n), lambda i: (0, 0)),
                      pl.BlockSpec((1, n), lambda i: (0, 0)),
                      pl.BlockSpec((tm, n), lambda i: (i, 0)),
                      pl.BlockSpec((1, n), lambda i: (0, 0)),
                      pl.BlockSpec((1, n), lambda i: (0, 0))],
            out_specs=pl.BlockSpec((tm, n), lambda i: (i, 0)),
            compiler_params=pltpu.CompilerParams(
                dimension_semantics=("parallel",),
                vmem_limit_bytes=VMEM_LIMIT),
        )(x, w, b.reshape(1, n), residual, gamma.reshape(1, n), beta.reshape(1, n))
    tk = _pick_tile(k, (1024, 512, 256, 128))
    return pl.pallas_call(
        functools.partial(_linear_res_ln_tiled_kernel, eps=eps),
        out_shape=jax.ShapeDtypeStruct((m, n), jnp.bfloat16),
        grid=(m // tm, k // tk),
        in_specs=[pl.BlockSpec((tm, tk), lambda i, kk: (i, kk)),
                  pl.BlockSpec((tk, n), lambda i, kk: (kk, 0)),
                  pl.BlockSpec((1, n), lambda i, kk: (0, 0)),
                  pl.BlockSpec((tm, n), lambda i, kk: (i, 0)),
                  pl.BlockSpec((1, n), lambda i, kk: (0, 0)),
                  pl.BlockSpec((1, n), lambda i, kk: (0, 0))],
        out_specs=pl.BlockSpec((tm, n), lambda i, kk: (i, 0)),
        scratch_shapes=[pltpu.VMEM((tm, n), jnp.float32)],
        compiler_params=pltpu.CompilerParams(
            dimension_semantics=("parallel", "arbitrary"),
            vmem_limit_bytes=VMEM_LIMIT),
    )(x, w, b.reshape(1, n), residual, gamma.reshape(1, n), beta.reshape(1, n))


# --------------------------------------------------------------------------
# LayerNorm-only kernel (embedding LN; f32 math, bf16 output)
# --------------------------------------------------------------------------
def _layernorm_kernel(x_ref, g_ref, b_ref, o_ref, *, eps):
    xx = x_ref[...].astype(jnp.float32)
    o_ref[...] = _ln_epilogue(xx, g_ref[...], b_ref[...], eps).astype(o_ref.dtype)


def layernorm(x, gamma, beta, eps=1e-12):
    m, n = x.shape
    tm = _pick_tile(m, (512, 256, 128, 64, 32, 16, 8))
    return pl.pallas_call(
        functools.partial(_layernorm_kernel, eps=eps),
        out_shape=jax.ShapeDtypeStruct((m, n), jnp.bfloat16),
        grid=(m // tm,),
        in_specs=[pl.BlockSpec((tm, n), lambda i: (i, 0)),
                  pl.BlockSpec((1, n), lambda i: (0, 0)),
                  pl.BlockSpec((1, n), lambda i: (0, 0))],
        out_specs=pl.BlockSpec((tm, n), lambda i: (i, 0)),
        compiler_params=pltpu.CompilerParams(
            dimension_semantics=("parallel",),
            vmem_limit_bytes=VMEM_LIMIT),
    )(x, gamma.reshape(1, n), beta.reshape(1, n))


# --------------------------------------------------------------------------
# Self-attention: consumes fused [B, S, 3H] bf16 QKV, writes [B, S, H] bf16.
# Per-head Q/K/V read straight from the ref and per-head results stored
# directly into o_ref column slices (no concatenate -> bounded live ranges).
# --------------------------------------------------------------------------
def _attention_kernel(qkv_ref, bias_ref, o_ref, *, nh, hd, scale):
    h = nh * hd
    bias = bias_ref[0]                                        # [1, S] additive mask
    for head in range(nh):
        q = qkv_ref[0, :, head * hd:(head + 1) * hd]          # [S, hd] bf16
        k = qkv_ref[0, :, h + head * hd:h + (head + 1) * hd]
        v = qkv_ref[0, :, 2 * h + head * hd:2 * h + (head + 1) * hd]
        s = jax.lax.dot_general(q, k, (((1,), (1,)), ((), ())),
                                preferred_element_type=jnp.float32)   # [S, S] f32
        s = s * scale + bias
        s = s - jnp.max(s, axis=-1, keepdims=True)
        e = jnp.exp(s)
        p = e * pl.reciprocal(jnp.sum(e, axis=-1, keepdims=True), approx=True)
        ctx = jnp.dot(p.astype(jnp.bfloat16), v,
                      preferred_element_type=jnp.float32)             # [S, hd]
        o_ref[0, :, head * hd:(head + 1) * hd] = ctx.astype(o_ref.dtype)


def attention(qkv, mask_bias, num_heads):
    b, s, three_h = qkv.shape
    h = three_h // 3
    hd = h // num_heads
    return pl.pallas_call(
        functools.partial(_attention_kernel, nh=num_heads, hd=hd,
                          scale=1.0 / math.sqrt(hd)),
        out_shape=jax.ShapeDtypeStruct((b, s, h), jnp.bfloat16),
        grid=(b,),
        in_specs=[pl.BlockSpec((1, s, three_h), lambda bi: (bi, 0, 0)),
                  pl.BlockSpec((1, 1, s), lambda bi: (bi, 0, 0))],
        out_specs=pl.BlockSpec((1, s, h), lambda bi: (bi, 0, 0)),
        compiler_params=pltpu.CompilerParams(
            dimension_semantics=("parallel",),
            vmem_limit_bytes=VMEM_LIMIT),
    )(qkv, mask_bias)


# --------------------------------------------------------------------------
# Fully fused DPCNN head: region conv -> 2x (pad1+conv) -> pyramid -> FC,
# one pallas_call with grid=(B,).  The shrinking feature map ping-pongs
# between two zero-bordered VMEM scratches; the stride-2 max-pool reads the
# resident buffer with strided pl.ds loads (no restaging store).
# --------------------------------------------------------------------------
def _dpcnn_head_kernel(enc_ref, wr_ref, br_ref, wc_ref, bc_ref, wfc_ref, bfc_ref,
                       o_ref, buf_a, buf_b):
    s = enc_ref.shape[1]
    c = wc_ref.shape[-1]
    zero_row = jnp.zeros((1, c), jnp.float32)
    buf_a[0:1, :] = zero_row      # top zero border stays fixed for all levels
    buf_b[0:1, :] = zero_row

    def conv3(src, l):
        # pad1 (zero rows at 0 and l+1 already in `src`) + Conv2d(F, F, (3,1)).
        acc = bc_ref[...]
        for k in range(3):
            acc = acc + jnp.dot(src[k:k + l, :].astype(jnp.bfloat16), wc_ref[k],
                                preferred_element_type=jnp.float32)
        return acc

    def stage(dst, y, l):
        dst[1:l + 1, :] = y                  # interior rows 1..l
        dst[l + 1:l + 2, :] = zero_row       # bottom zero border for this level

    # ---- conv_region: Conv2d(1, F, (3, hidden)) over encoder_out [S, hidden] -> [S-2, C]
    x = enc_ref[0]                           # [S, hidden] bf16
    l = s - 2
    out = br_ref[...]
    for k in range(3):
        out = out + jnp.dot(x[k:k + l, :], wr_ref[k], preferred_element_type=jnp.float32)

    # ---- stem: pad1+conv, pad1+conv.  The reference's `out - self.relu(out)` statements
    #      are discarded expressions, so NO ReLU is applied here (faithful to the bug).
    stage(buf_a, out, l)
    out = conv3(buf_a, l)
    stage(buf_b, out, l)
    out = conv3(buf_b, l)

    # ---- while out.size()[2] > 2: _block   (static shapes -> trace-time Python loop)
    if l > 2:
        stage(buf_a, out, l)
    cur, other = buf_a, buf_b
    while l > 2:
        lp = (l - 2) // 2 + 1
        # pad2 (zero row at l+1 already resident) + MaxPool2d((3,1), stride=2) read
        # directly from the resident feature map (rows 1..l) via strided loads.
        px = jnp.maximum(
            jnp.maximum(cur[pl.ds(1, lp, stride=2), :],
                        cur[pl.ds(2, lp, stride=2), :]),
            cur[pl.ds(3, lp, stride=2), :])
        # pad1 -> relu -> conv  (relu(pad1(.)) == pad1(relu(.)) since relu(0)==0)
        stage(other, jnp.maximum(px, 0.0), lp)
        y = conv3(other, lp)
        stage(cur, jnp.maximum(y, 0.0), lp)
        y = conv3(cur, lp)
        out = y + px
        if lp > 2:                            # next level reads it from VMEM
            stage(other, out, lp)
            cur, other = other, cur
        l = lp

    # ---- .squeeze() + fc
    # TODO(synk): assumes the pyramid terminates at L == 1 (true for these shapes);
    #             at L == 2 PyTorch's .squeeze()+Linear keeps both rows.
    feat = out[0:1, :].astype(jnp.bfloat16)                               # [1, C]
    logits = jnp.dot(feat, wfc_ref[...], preferred_element_type=jnp.float32) + bfc_ref[...]
    o_ref[0] = logits.astype(o_ref.dtype)


def dpcnn_head(enc, p):
    b, s, hidden = enc.shape
    cpad = p["conv_w"].shape[-1]
    nc = p["fc_w"].shape[-1]
    out = pl.pallas_call(
        _dpcnn_head_kernel,
        out_shape=jax.ShapeDtypeStruct((b, 1, nc), jnp.float32),
        grid=(b,),
        in_specs=[pl.BlockSpec((1, s, hidden), lambda bi: (bi, 0, 0)),
                  pl.BlockSpec((3, hidden, cpad), lambda bi: (0, 0, 0)),
                  pl.BlockSpec((1, cpad), lambda bi: (0, 0)),
                  pl.BlockSpec((3, cpad, cpad), lambda bi: (0, 0, 0)),
                  pl.BlockSpec((1, cpad), lambda bi: (0, 0)),
                  pl.BlockSpec((cpad, nc), lambda bi: (0, 0)),
                  pl.BlockSpec((1, nc), lambda bi: (0, 0))],
        out_specs=pl.BlockSpec((1, 1, nc), lambda bi: (bi, 0, 0)),
        scratch_shapes=[pltpu.VMEM((s + 2, cpad), jnp.float32),
                        pltpu.VMEM((s + 2, cpad), jnp.float32)],
        compiler_params=pltpu.CompilerParams(
            dimension_semantics=("parallel",),
            vmem_limit_bytes=VMEM_LIMIT),
    )(enc, p["conv_region_w"], p["conv_region_b"], p["conv_w"], p["conv_b"],
      p["fc_w"], p["fc_b"])
    return out.reshape(b, nc)


# --------------------------------------------------------------------------
# BERT encoder (glue orchestrating the Pallas kernels; no transposes)
# --------------------------------------------------------------------------
def bert_encoder(p, input_ids, attention_mask):
    b, s = input_ids.shape
    h = p["word_emb"].shape[1]
    nh = p["num_heads"]
    # embedding lookup is plain-JAX glue (gather)
    emb = (p["word_emb"][input_ids]
           + p["pos_emb"][jnp.arange(s)][None, :, :]
           + p["type_emb"][0][None, None, :])
    x = layernorm(emb.reshape(b * s, h), p["emb_ln_g"], p["emb_ln_b"])     # bf16 [B*S, H]
    mask_bias = ((1.0 - attention_mask.astype(jnp.float32)) * -10000.0).reshape(b, 1, s)
    for lp in p["layers"]:
        qkv = linear(x, lp["w_qkv"], lp["b_qkv"])                          # bf16 [B*S, 3H]
        ctx = attention(qkv.reshape(b, s, 3 * h), mask_bias, nh)           # bf16 [B, S, H]
        x = linear_res_layernorm(ctx.reshape(b * s, h), lp["wo"], lp["bo"],
                                 x, lp["ln1_g"], lp["ln1_b"])              # attn proj + LN
        inter = linear(x, lp["wi"], lp["bi"], activation="gelu")           # FFN up + gelu
        x = linear_res_layernorm(inter, lp["wf"], lp["bf"],
                                 x, lp["ln2_g"], lp["ln2_b"])              # FFN down + LN
    return x.reshape(b, s, h)


# --------------------------------------------------------------------------
# Model forward (mirrors Model.forward)
# --------------------------------------------------------------------------
def model_forward(params, x):
    context, _, mask = x                     # context = x[0]; mask = x[2]
    enc = bert_encoder(params["bert"], context, mask)     # bf16 [B, S, H]
    return dpcnn_head(enc, params)                        # f32 [B, num_classes]


# --------------------------------------------------------------------------
# Deterministic parameter init (shapes follow Model.__init__; bf16 weights,
# DPCNN channel axis zero-padded to a lane multiple)
# --------------------------------------------------------------------------
def init_params(key, *, vocab, max_pos, hidden, num_heads, num_layers,
                intermediate, num_filters, num_classes):
    keys = iter(jax.random.split(key, 16 + 8 * num_layers))

    def nrm(shape, scale=0.02, dtype=jnp.float32):
        return (jax.random.normal(next(keys), shape, jnp.float32) * scale).astype(dtype)

    layers = []
    for _ in range(num_layers):
        layers.append(dict(
            w_qkv=nrm((hidden, 3 * hidden), dtype=jnp.bfloat16),
            b_qkv=jnp.zeros((3 * hidden,), jnp.float32),
            wo=nrm((hidden, hidden), dtype=jnp.bfloat16),
            bo=jnp.zeros((hidden,), jnp.float32),
            ln1_g=jnp.ones((hidden,), jnp.float32),
            ln1_b=jnp.zeros((hidden,), jnp.float32),
            wi=nrm((hidden, intermediate), dtype=jnp.bfloat16),
            bi=jnp.zeros((intermediate,), jnp.float32),
            wf=nrm((intermediate, hidden), dtype=jnp.bfloat16),
            bf=jnp.zeros((hidden,), jnp.float32),
            ln2_g=jnp.ones((hidden,), jnp.float32),
            ln2_b=jnp.zeros((hidden,), jnp.float32),
        ))
    bert = dict(
        word_emb=nrm((vocab, hidden)),
        pos_emb=nrm((max_pos, hidden)),
        type_emb=nrm((2, hidden)),
        emb_ln_g=jnp.ones((hidden,), jnp.float32),
        emb_ln_b=jnp.zeros((hidden,), jnp.float32),
        num_heads=num_heads,
        layers=layers,
    )

    # DPCNN head: pad the output-channel axis to a lane multiple; padded channels are
    # exact zeros (zero weights + zero bias) everywhere, so results match the unpadded
    # model.  (If num_filters > 128, consider padding to 256 for the v6e/v7x MXU.)
    cpad = max(_round_up(num_filters, LANE), LANE)
    # torch Conv2d(1, F, (3, hidden)).weight is [F, 1, 3, hidden]; stored as [3, hidden, Cpad].
    conv_region_w = jnp.pad(nrm((3, hidden, num_filters), 0.05),
                            ((0, 0), (0, 0), (0, cpad - num_filters))).astype(jnp.bfloat16)
    # torch Conv2d(F, F, (3, 1)).weight is [F, F, 3, 1]; stored as [3, Cpad, Cpad].
    conv_w = jnp.zeros((3, cpad, cpad), jnp.float32)
    conv_w = conv_w.at[:, :num_filters, :num_filters].set(
        nrm((3, num_filters, num_filters), 0.05)).astype(jnp.bfloat16)
    fc_w = jnp.zeros((cpad, num_classes), jnp.float32)
    fc_w = fc_w.at[:num_filters, :].set(nrm((num_filters, num_classes), 0.05)).astype(jnp.bfloat16)

    return dict(
        bert=bert,
        conv_region_w=conv_region_w,
        conv_region_b=jnp.zeros((1, cpad), jnp.float32),
        conv_w=conv_w,
        conv_b=jnp.zeros((1, cpad), jnp.float32),
        fc_w=fc_w,
        fc_b=jnp.zeros((1, num_classes), jnp.float32),
    )


if __name__ == "__main__":
    B, S, HIDDEN = 2, 8, 32
    NUM_FILTERS, NUM_CLASSES = 16, 5
    VOCAB, MAX_POS, HEADS, LAYERS, INTER = 30, 16, 4, 2, 64

    params = init_params(jax.random.PRNGKey(1234), vocab=VOCAB, max_pos=MAX_POS,
                         hidden=HIDDEN, num_heads=HEADS, num_layers=LAYERS,
                         intermediate=INTER, num_filters=NUM_FILTERS,
                         num_classes=NUM_CLASSES)

    key = jax.random.PRNGKey(0)
    k_ctx, _ = jax.random.split(key)
    context = jax.random.randint(k_ctx, (B, S), 0, VOCAB, dtype=jnp.int32)
    seq_len = jnp.full((B,), S, dtype=jnp.int32)
    mask = jnp.ones((B, S), dtype=jnp.int32).at[1, 6:].set(0)   # pad out last 2 tokens of ex. 1
    x = (context, seq_len, mask)

    logits = model_forward(params, x)
    logits = jax.block_until_ready(logits)
    assert logits.shape == (B, NUM_CLASSES), logits.shape
    print("KERNEL_OK")
</pallas_src>

<mosaic_0001>
module attributes {stable_mosaic.version = 11 : i64} {
  func.func @_layernorm_kernel(%arg0: i32, %arg1: memref<16x32xf32, #tpu.memory_space<vmem>>, %arg2: memref<1x32xf32, #tpu.memory_space<vmem>>, %arg3: memref<1x32xf32, #tpu.memory_space<vmem>>, %arg4: memref<16x32xbf16, #tpu.memory_space<vmem>>) attributes {dimension_semantics = [#tpu.dimension_semantics<parallel>], iteration_bounds = array<i64: 1>, scalar_prefetch = 0 : i64, scratch_operands = 0 : i64, tpu.core_type = #tpu.core_type<tc>, window_params = [{transform_indices = @transform_0, window_bounds = array<i64: 16, 32>}, {pipeline_mode = #tpu.pipeline_mode<synchronous>, transform_indices = @transform_1, window_bounds = array<i64: 1, 32>}, {pipeline_mode = #tpu.pipeline_mode<synchronous>, transform_indices = @transform_2, window_bounds = array<i64: 1, 32>}, {transform_indices = @transform_3, window_bounds = array<i64: 16, 32>}]} {
    %c0 = arith.constant 0 : index
    %c0_0 = arith.constant 0 : index
    %0 = vector.load %arg1[%c0, %c0_0] : memref<16x32xf32, #tpu.memory_space<vmem>>, vector<16x32xf32>
    %c0_1 = arith.constant 0 : index
    %c0_2 = arith.constant 0 : index
    %1 = vector.load %arg2[%c0_1, %c0_2] : memref<1x32xf32, #tpu.memory_space<vmem>>, vector<1x32xf32>
    %c0_3 = arith.constant 0 : index
    %c0_4 = arith.constant 0 : index
    %2 = vector.load %arg3[%c0_3, %c0_4] : memref<1x32xf32, #tpu.memory_space<vmem>>, vector<1x32xf32>
    %cst = arith.constant dense<0.000000e+00> : vector<16xf32>
    %3 = vector.multi_reduction <add>, %0, %cst [1] : vector<16x32xf32> to vector<16xf32>
    %4 = vector.shape_cast %3 : vector<16xf32> to vector<16x1xf32>
    %cst_5 = arith.constant 3.200000e+01 : f32
    %5 = vector.broadcast %cst_5 : f32 to vector<16x1xf32>
    %6 = arith.divf %4, %5 : vector<16x1xf32>
    %7 = vector.broadcast %6 : vector<16x1xf32> to vector<16x32xf32>
    %8 = arith.subf %0, %7 : vector<16x32xf32>
    %9 = arith.mulf %8, %8 : vector<16x32xf32>
    %cst_6 = arith.constant dense<0.000000e+00> : vector<16xf32>
    %10 = vector.multi_reduction <add>, %9, %cst_6 [1] : vector<16x32xf32> to vector<16xf32>
    %11 = vector.shape_cast %10 : vector<16xf32> to vector<16x1xf32>
    %cst_7 = arith.constant 3.200000e+01 : f32
    %12 = vector.broadcast %cst_7 : f32 to vector<16x1xf32>
    %13 = arith.divf %11, %12 : vector<16x1xf32>
    %14 = vector.broadcast %6 : vector<16x1xf32> to vector<16x32xf32>
    %15 = arith.subf %0, %14 : vector<16x32xf32>
    %cst_8 = arith.constant 9.99999996E-13 : f32
    %16 = vector.broadcast %cst_8 : f32 to vector<16x1xf32>
    %17 = arith.addf %13, %16 : vector<16x1xf32>
    %18 = math.rsqrt %17 : vector<16x1xf32>
    %19 = vector.broadcast %18 : vector<16x1xf32> to vector<16x32xf32>
    %20 = arith.mulf %15, %19 : vector<16x32xf32>
    %21 = vector.broadcast %1 : vector<1x32xf32> to vector<16x32xf32>
    %22 = arith.mulf %20, %21 : vector<16x32xf32>
    %23 = vector.broadcast %2 : vector<1x32xf32> to vector<16x32xf32>
    %24 = arith.addf %22, %23 : vector<16x32xf32>
    %25 = arith.truncf %24 : vector<16x32xf32> to vector<16x32xbf16>
    %c0_9 = arith.constant 0 : index
    %c0_10 = arith.constant 0 : index
    %26 = vector.load %arg4[%c0_9, %c0_10] : memref<16x32xbf16, #tpu.memory_space<vmem>>, vector<16x32xbf16>
    tpu.vector_store %arg4[%c0_9, %c0_10], %25 {strides = array<i32>} : memref<16x32xbf16, #tpu.memory_space<vmem>>, vector<16x32xbf16>,
    return
  }
  func.func @transform_0(%arg0: i32) -> (i32, i32) {
    %c0_i32 = arith.constant 0 : i32
    %c0_i32_0 = arith.constant 0 : i32
    return %arg0, %c0_i32 : i32, i32
  }
  func.func @transform_1(%arg0: i32) -> (i32, i32) {
    %c0_i32 = arith.constant 0 : i32
    %c0_i32_0 = arith.constant 0 : i32
    %c0_i32_1 = arith.constant 0 : i32
    return %c0_i32, %c0_i32_0 : i32, i32
  }
  func.func @transform_2(%arg0: i32) -> (i32, i32) {
    %c0_i32 = arith.constant 0 : i32
    %c0_i32_0 = arith.constant 0 : i32
    %c0_i32_1 = arith.constant 0 : i32
    return %c0_i32, %c0_i32_0 : i32, i32
  }
  func.func @transform_3(%arg0: i32) -> (i32, i32) {
    %c0_i32 = arith.constant 0 : i32
    %c0_i32_0 = arith.constant 0 : i32
    return %arg0, %c0_i32 : i32, i32
  }
}

</mosaic_0001>

<llo_original>
// kernel: tpu_custom_call.1
$region0: #{tpu_custom_call.1}
  #allocation0 [shape = 'u32[]', space=smem, size = 0x4, offset = 0x4, fixed_abs, tag = 'smem constant byte address 0x4 - core index']
  #allocation1 [shape = 'u32[144,128]{1,0:T(1,128)}', space=vmem, size = 0x12000, scoped, tag = 'internal scratch']
  %s0 = inlined_call_operand.hbm [shape: f32[16,32], index: 0, kind: input, shape index: {}]
  %s1 = inlined_call_operand.vmem [shape: f32[1,32], index: 1, kind: input, shape index: {}]
  %s2 = inlined_call_operand.vmem [shape: f32[1,32], index: 2, kind: input, shape index: {}]
  %s3 = inlined_call_operand.hbm [shape: bf16[16,32], index: 3, kind: output, shape index: {}]
  %s4 = sld [smem:[#allocation0]]
  $region26: #{tpu_custom_call.1} parent=0
    _
  %s6 = ssub.s32 1, %s4
  %s7 = scalar_select 0, %s6, %s4
  $region1: #{tpu_custom_call.1} parent=0
    #allocation2 [shape = 'u8[8192]{0}', space=vmem, size = 0x2000, scoped, tag = 'input window, operand 0, single buffered']
    #allocation3 [shape = 's32[1]{0}', space=sflag, size = 0x4, scoped, tag = 'scoped memory for tpu_custom_call.1']
    #allocation4 [shape = 's32[1]{0}', space=sflag, size = 0x4, scoped, tag = 'scoped memory for tpu_custom_call.1']
    #allocation5 [shape = 'u8[4096]{0}', space=vmem, size = 0x1000, scoped, tag = 'output window, operand 0, single buffered']
    %8 = vsyncpa [#allocation3], 0
    %9 = vsyncpa [#allocation4], 0
    // Predicated region
    $region2: #{tpu_custom_call.1} parent=1 // pred_check
      _
    $region3: #{tpu_custom_call.1} parent=1 // pred_check_branch
      %11 = sbr.rel (0) target = $region5
    $region4: #{tpu_custom_call.1} parent=1 // pred_region
      %s13 = ssub.s32 256, 256
      %14 = vsyncadd [#allocation3], %s13
      %s15 = sshll.u32 [#allocation2], 4
      %s16 = int_to_ptr.vmem [resolvable:$true] %s15
      %21 = dma.hbm_to_vmem [thread:$0]  %s0, 256, %s16, [#allocation3], 128, 128, 8
    $region5: #{tpu_custom_call.1} parent=1 // pred_fallthru
      _
    // Predicated region
    $region6: #{tpu_custom_call.1} parent=1 // pred_check
      _
    $region7: #{tpu_custom_call.1} parent=1 // pred_check_branch
      %23 = sbr.rel (0) target = $region9
    $region8: #{tpu_custom_call.1} parent=1 // pred_region
      _
    $region9: #{tpu_custom_call.1} parent=1 // pred_fallthru
      _
    // Predicated region
    $region10: #{tpu_custom_call.1} parent=1 // pred_check
      _
    $region11: #{tpu_custom_call.1} parent=1 // pred_check_branch
      %25 = sbr.rel (0) target = $region13
    $region12: #{tpu_custom_call.1} parent=1 // pred_region
      _
    $region13: #{tpu_custom_call.1} parent=1 // pred_fallthru
      _
    // Predicated region
    $region14: #{tpu_custom_call.1} parent=1 // pred_check
      _
    $region15: #{tpu_custom_call.1} parent=1 // pred_check_branch
      %27 = sbr.rel (0) target = $region17
    $region16: #{tpu_custom_call.1} parent=1 // pred_region
      %28 = dma.done [#allocation3], 256
    $region17: #{tpu_custom_call.1} parent=1 // pred_fallthru
      _
    %v29 = vld [vmem:[#allocation2] sm:$0xff]
    %v30 = vld [vmem:[#allocation2 + $0x8] sm:$0xff]
    %v31 = vld [vmem:[%s1] sm:$0x1]
    %v32 = vld [vmem:[%s2] sm:$0x1]
    %vm33 = vcmask 261120
    %v34 = vsel %vm33, %v29, 0.0
    %35 = vadd.xlane.f32.xlu0 %v34
    %v36 = vpop.xlane.xlu0 %35
    %v37 = vsel %vm33, %v30, 0.0
    %38 = vadd.xlane.f32.xlu0 %v37
    %v39 = vpop.xlane.xlu0 %38
    %v40 = vrcp.pop 32.0
    %v41 = vmul.f32 %v36, %v40
    %v42 = vmul.f32 %v39, %v40
    %v43 = vsub.f32 %v29, %v41
    %v44 = vsub.f32 %v30, %v42
    %v45 = vmul.f32 %v43, %v43
    %v46 = vmul.f32 %v44, %v44
    %v47 = vsel %vm33, %v45, 0.0
    %48 = vadd.xlane.f32.xlu0 %v47
    %v49 = vpop.xlane.xlu0 %48
    %v50 = vsel %vm33, %v46, 0.0
    %51 = vadd.xlane.f32.xlu0 %v50
    %v52 = vpop.xlane.xlu0 %51
    %v53 = vmul.f32 %v49, %v40
    %v54 = vmul.f32 %v52, %v40
    %v55 = vadd.f32 %v53, 1e-12
    %v56 = vadd.f32 %v54, 1e-12
    %v57 = vrsqrt.pop %v55
    %v58 = vrsqrt.pop %v56
    %v59 = vmul.f32 %v43, %v57
    %v60 = vmul.f32 %v44, %v58
    %v62 = vlaneseq
    %v63 = vshrl.u32 %v62, 7
    %v64 = vsub.s32 0, %v63
    %v65 = vrot.slane %v31, %v64
    %v67 = vmul.f32 %v59, %v65
    %v68 = vmul.f32 %v60, %v65
    %v70 = vlaneseq
    %v71 = vshrl.u32 %v70, 7
    %v72 = vsub.s32 0, %v71
    %v73 = vrot.slane %v32, %v72
    %v75 = vadd.f32 %v67, %v73
    %v76 = vadd.f32 %v68, %v73
    %v77 = vpack.c.bf16 %v76, %v75
    %v79 = vunpack.c.l.b16 %v77
    %v80 = vunpack.c.h.b16 %v77
    %v81 = vpack.c.b16 %v79, %v79
    %v82 = vpack.c.b16 %v80, %v80
    %vm85 = vcmask 257024
    %86 = vst.msk [vmem:[#allocation5] sm:$0xf] %vm85, %v81
    %87 = vst.msk [vmem:[#allocation5 + $0x4] sm:$0xf] %vm85, %v82
    // Predicated region
    $region18: #{tpu_custom_call.1} parent=1 // pred_check
      _
    $region19: #{tpu_custom_call.1} parent=1 // pred_check_branch
      %89 = sbr.rel (0) target = $region21
    $region20: #{tpu_custom_call.1} parent=1 // pred_region
      %s91 = ssub.s32 128, 128
      %92 = vsyncadd [#allocation4], %s91
      %s93 = sshll.u32 [#allocation5], 4
      %s94 = int_to_ptr.vmem [resolvable:$true] %s93
      %99 = dma.vmem_to_hbm [thread:$0]  %s94, 128, %s3, [#allocation4], 64, 64, 4
    $region21: #{tpu_custom_call.1} parent=1 // pred_fallthru
      _
    // Predicated region
    $region22: #{tpu_custom_call.1} parent=1 // pred_check
      _
    $region23: #{tpu_custom_call.1} parent=1 // pred_check_branch
      %101 = sbr.rel (0) target = $region25
    $region24: #{tpu_custom_call.1} parent=1 // pred_region
      %102 = dma.done [#allocation4], 128
    $region25: #{tpu_custom_call.1} parent=1 // pred_fallthru
      _
    %103 = vsyncpa [#allocation3], 1
    %104 = vsyncpa [#allocation4], 1

</llo_original>
